<compile_context>
chip_gen: v7x
topology: tpu7x:2x2x1
jax: 0.10.0
libtpu: 0.0.40
codegen_flags: <defaults>
</compile_context>

<pallas_src>
import functools

import jax
import jax.numpy as jnp
from jax import lax
from jax.experimental import pallas as pl
from jax.experimental.pallas import tpu as pltpu


def _round_up(x, m):
    return ((x + m - 1) // m) * m


def _binary_cancer_kernel(x_ref, w1_ref, b1_ref, w2_ref, b2_ref, out_ref):
    # x_ref  : (TILE_B, 30)   w1_ref: (15, 30)  b1_ref: (15, 1)
    # w2_ref : (1, 15)        b2_ref: (1, 1)    out_ref: (1, 1, TILE_B)
    x = x_ref[...]

    # fc: Linear(30, 15), computed transposed (batch on the lane axis):
    #   h_t = W1 @ x^T + b1  -> (15, TILE_B)
    h_t = lax.dot_general(
        w1_ref[...], x,
        dimension_numbers=(((1,), (1,)), ((), ())),   # NT: contract the 30-dims
        preferred_element_type=jnp.float32,
    ) + b1_ref[...]
    # relu
    h_t = jnp.maximum(h_t, 0.0)
    # fc2: Linear(15, 1):  o_t = W2 @ h_t + b2 -> (1, TILE_B), lane-dense.
    o_t = jnp.dot(w2_ref[...], h_t, preferred_element_type=jnp.float32) + b2_ref[...]
    # sigmoid (exp lands on the EUP; kernel is mem-bound so this is filler).
    out_ref[...] = jax.nn.sigmoid(o_t).reshape(out_ref.shape)


@functools.partial(jax.jit, static_argnames=("tile_b",))
def binary_cancer_forward(x, w1, b1, w2, b2, *, tile_b=1024):
    """Fused forward pass.

    x  : (B, 30)   w1 : (15, 30)  (PyTorch (out, in) layout)   b1 : (15,)
    w2 : (1, 15)   b2 : (1,)
    returns (B, 1) float32
    """
    B = x.shape[0]
    x = jnp.asarray(x, jnp.float32)
    w1 = jnp.asarray(w1, jnp.float32)                  # (15, 30)
    b1 = jnp.asarray(b1, jnp.float32).reshape(15, 1)   # (15, 1) broadcasts over lanes
    w2 = jnp.asarray(w2, jnp.float32)                  # (1, 15)
    b2 = jnp.asarray(b2, jnp.float32).reshape(1, 1)    # (1, 1)

    # Pick a batch tile and pad B up to a multiple of it (padded rows are
    # sliced off after the call, so they never affect results).
    tile_b = min(tile_b, _round_up(B, 8))
    b_pad = _round_up(B, tile_b)
    if b_pad != B:
        x = jnp.pad(x, ((0, b_pad - B), (0, 0)))
    num_tiles = b_pad // tile_b

    const = lambda shape: pl.BlockSpec(shape, lambda i: (0,) * len(shape))

    out_t = pl.pallas_call(
        _binary_cancer_kernel,
        out_shape=jax.ShapeDtypeStruct((num_tiles, 1, tile_b), jnp.float32),
        grid_spec=pltpu.PrefetchScalarGridSpec(
            num_scalar_prefetch=0,
            grid=(num_tiles,),
            in_specs=[
                pl.BlockSpec((tile_b, 30), lambda i: (i, 0)),  # x: tiled over batch
                const(w1.shape),                               # params stay resident
                const(b1.shape),
                const(w2.shape),
                const(b2.shape),
            ],
            out_specs=pl.BlockSpec((1, 1, tile_b), lambda i: (i, 0, 0)),
        ),
        compiler_params=pltpu.CompilerParams(
            dimension_semantics=("parallel",),  # megacore-shard batch on v7x
        ),
        cost_estimate=pl.CostEstimate(
            flops=930 * b_pad,
            transcendentals=b_pad,
            bytes_accessed=(30 * 4 + 4) * b_pad + (15 * 30 + 15 + 15 + 1) * 4,
        ),
    )(x, w1, b1, w2, b2)

    # (num_tiles, 1, TILE_B) -> (B, 1): row-major flatten preserves batch order.
    return out_t.reshape(b_pad, 1)[:B]


def _init_params(key):
    """Deterministic init mimicking nn.Linear's U(-1/sqrt(fan_in), 1/sqrt(fan_in))."""
    k1, k2, k3, k4 = jax.random.split(key, 4)
    bound1 = 1.0 / jnp.sqrt(30.0)
    bound2 = 1.0 / jnp.sqrt(15.0)
    w1 = jax.random.uniform(k1, (15, 30), jnp.float32, -bound1, bound1)
    b1 = jax.random.uniform(k2, (15,), jnp.float32, -bound1, bound1)
    w2 = jax.random.uniform(k3, (1, 15), jnp.float32, -bound2, bound2)
    b2 = jax.random.uniform(k4, (1,), jnp.float32, -bound2, bound2)
    return w1, b1, w2, b2


def _reference(x, w1, b1, w2, b2):
    h = jnp.maximum(x @ w1.T + b1, 0.0)
    return jax.nn.sigmoid(h @ w2.T + b2)


if __name__ == "__main__":
    key = jax.random.PRNGKey(0)
    k_x, k_p = jax.random.split(key)
    w1, b1, w2, b2 = _init_params(k_p)

    # Case 1: small batch not a multiple of 8 (exercises tail padding).
    # Case 2: multi-tile batch (exercises the parallel batch grid + padding).
    for batch, tile_b in ((10, 1024), (304, 128)):
        x = jax.random.normal(jax.random.fold_in(k_x, batch), (batch, 30), jnp.float32)
        out = binary_cancer_forward(x, w1, b1, w2, b2, tile_b=tile_b)
        out = jax.block_until_ready(out)

        ref = _reference(x, w1, b1, w2, b2)
        assert out.shape == (batch, 1), out.shape
        # f64 PyTorch module reimplemented in f32 -> f32-level tolerance.
        assert bool(jnp.allclose(out, ref, atol=1e-4, rtol=1e-4)), float(
            jnp.max(jnp.abs(out - ref))
        )

    print("KERNEL_OK")
</pallas_src>

<mosaic_0001>
module attributes {stable_mosaic.version = 11 : i64} {
  func.func @_binary_cancer_kernel(%arg0: i32, %arg1: memref<16x30xf32, #tpu.memory_space<vmem>>, %arg2: memref<15x30xf32, #tpu.memory_space<vmem>>, %arg3: memref<15x1xf32, #tpu.memory_space<vmem>>, %arg4: memref<1x15xf32, #tpu.memory_space<vmem>>, %arg5: memref<1x1xf32, #tpu.memory_space<vmem>>, %arg6: memref<1x1x16xf32, #tpu.memory_space<vmem>>) attributes {dimension_semantics = [#tpu.dimension_semantics<parallel>], iteration_bounds = array<i64: 1>, scalar_prefetch = 0 : i64, scratch_operands = 0 : i64, tpu.core_type = #tpu.core_type<tc>, window_params = [{transform_indices = @transform_0, window_bounds = array<i64: 16, 30>}, {pipeline_mode = #tpu.pipeline_mode<synchronous>, transform_indices = @transform_1, window_bounds = array<i64: 15, 30>}, {pipeline_mode = #tpu.pipeline_mode<synchronous>, transform_indices = @transform_2, window_bounds = array<i64: 15, 1>}, {pipeline_mode = #tpu.pipeline_mode<synchronous>, transform_indices = @transform_3, window_bounds = array<i64: 1, 15>}, {pipeline_mode = #tpu.pipeline_mode<synchronous>, transform_indices = @transform_4, window_bounds = array<i64: 1, 1>}, {transform_indices = @transform_5, window_bounds = array<i64: 1, 1, 16>}]} {
    %c0 = arith.constant 0 : index
    %c0_0 = arith.constant 0 : index
    %0 = vector.load %arg1[%c0, %c0_0] : memref<16x30xf32, #tpu.memory_space<vmem>>, vector<16x30xf32>
    %c0_1 = arith.constant 0 : index
    %c0_2 = arith.constant 0 : index
    %1 = vector.load %arg2[%c0_1, %c0_2] : memref<15x30xf32, #tpu.memory_space<vmem>>, vector<15x30xf32>
    %cst = arith.constant dense<0.000000e+00> : vector<15x16xf32>
    %2 = tpu.matmul %1, %0, %cst {dimension_numbers = #tpu.dot_dimension_numbers<[1], [1], [0], [0], [0, 0, 1, 0], [], []>} : vector<15x30xf32>, vector<16x30xf32>, vector<15x16xf32> -> vector<15x16xf32>
    %c0_3 = arith.constant 0 : index
    %c0_4 = arith.constant 0 : index
    %3 = vector.load %arg3[%c0_3, %c0_4] : memref<15x1xf32, #tpu.memory_space<vmem>>, vector<15x1xf32>
    %4 = vector.broadcast %3 : vector<15x1xf32> to vector<15x16xf32>
    %5 = arith.addf %2, %4 : vector<15x16xf32>
    %cst_5 = arith.constant 0.000000e+00 : f32
    %6 = vector.broadcast %cst_5 : f32 to vector<15x16xf32>
    %7 = arith.maximumf %5, %6 : vector<15x16xf32>
    %c0_6 = arith.constant 0 : index
    %c0_7 = arith.constant 0 : index
    %8 = vector.load %arg4[%c0_6, %c0_7] : memref<1x15xf32, #tpu.memory_space<vmem>>, vector<1x15xf32>
    %cst_8 = arith.constant dense<0.000000e+00> : vector<1x16xf32>
    %9 = tpu.matmul %8, %7, %cst_8 {dimension_numbers = #tpu.dot_dimension_numbers<[1], [0], [0], [1], [0, 0, 1, 1], [], []>} : vector<1x15xf32>, vector<15x16xf32>, vector<1x16xf32> -> vector<1x16xf32>
    %c0_9 = arith.constant 0 : index
    %c0_10 = arith.constant 0 : index
    %10 = vector.load %arg5[%c0_9, %c0_10] : memref<1x1xf32, #tpu.memory_space<vmem>>, vector<1x1xf32>
    %11 = vector.broadcast %10 : vector<1x1xf32> to vector<1x16xf32>
    %12 = arith.addf %9, %11 : vector<1x16xf32>
    %13 = arith.negf %12 : vector<1x16xf32>
    %14 = math.exp %13 : vector<1x16xf32>
    %cst_11 = arith.constant 1.000000e+00 : f32
    %15 = vector.broadcast %cst_11 : f32 to vector<1x16xf32>
    %16 = arith.addf %15, %14 : vector<1x16xf32>
    %17 = arith.divf %15, %16 : vector<1x16xf32>
    %18 = vector.shape_cast %17 : vector<1x16xf32> to vector<1x1x16xf32>
    %c0_12 = arith.constant 0 : index
    %c0_13 = arith.constant 0 : index
    %c0_14 = arith.constant 0 : index
    %19 = vector.load %arg6[%c0_12, %c0_13, %c0_14] : memref<1x1x16xf32, #tpu.memory_space<vmem>>, vector<1x1x16xf32>
    tpu.vector_store %arg6[%c0_12, %c0_13, %c0_14], %18 {strides = array<i32>} : memref<1x1x16xf32, #tpu.memory_space<vmem>>, vector<1x1x16xf32>,
    return
  }
  func.func @transform_0(%arg0: i32) -> (i32, i32) {
    %c0_i32 = arith.constant 0 : i32
    %c0_i32_0 = arith.constant 0 : i32
    return %arg0, %c0_i32 : i32, i32
  }
  func.func @transform_1(%arg0: i32) -> (i32, i32) {
    %c0_i32 = arith.constant 0 : i32
    %c0_i32_0 = arith.constant 0 : i32
    %c0_i32_1 = arith.constant 0 : i32
    return %c0_i32, %c0_i32_0 : i32, i32
  }
  func.func @transform_2(%arg0: i32) -> (i32, i32) {
    %c0_i32 = arith.constant 0 : i32
    %c0_i32_0 = arith.constant 0 : i32
    %c0_i32_1 = arith.constant 0 : i32
    return %c0_i32, %c0_i32_0 : i32, i32
  }
  func.func @transform_3(%arg0: i32) -> (i32, i32) {
    %c0_i32 = arith.constant 0 : i32
    %c0_i32_0 = arith.constant 0 : i32
    %c0_i32_1 = arith.constant 0 : i32
    return %c0_i32, %c0_i32_0 : i32, i32
  }
  func.func @transform_4(%arg0: i32) -> (i32, i32) {
    %c0_i32 = arith.constant 0 : i32
    %c0_i32_0 = arith.constant 0 : i32
    %c0_i32_1 = arith.constant 0 : i32
    return %c0_i32, %c0_i32_0 : i32, i32
  }
  func.func @transform_5(%arg0: i32) -> (i32, i32, i32) {
    %c0_i32 = arith.constant 0 : i32
    %c0_i32_0 = arith.constant 0 : i32
    %c0_i32_1 = arith.constant 0 : i32
    return %arg0, %c0_i32, %c0_i32_0 : i32, i32, i32
  }
}

</mosaic_0001>

<llo_original>
// kernel: binary_cancer_forward.1
$region0: #{binary_cancer_forward.1}
  #allocation0 [shape = 'u32[]', space=smem, size = 0x4, offset = 0x4, fixed_abs, tag = 'smem constant byte address 0x4 - core index']
  #allocation1 [shape = 'u32[144,128]{1,0:T(1,128)}', space=vmem, size = 0x12000, scoped, tag = 'internal scratch']
  #allocation2 [shape = 'f32[1,1]{1,0:T(1,128)S(1)}', space=vmem, size = 0x200, scoped, tag = 'scoped memory for binary_cancer_forward.1']
  %s0 = inlined_call_operand.vmem [shape: f32[16,30], index: 0, kind: input, shape index: {}]
  %s1 = inlined_call_operand.vmem [shape: f32[15,30], index: 1, kind: input, shape index: {}]
  %s2 = inlined_call_operand.vmem [shape: f32[15,1], index: 2, kind: input, shape index: {}]
  %s3 = inlined_call_operand.vmem [shape: f32[1,15], index: 3, kind: input, shape index: {}]
  %s4 = inlined_call_operand.<no memory space> [shape: f32[1,1], index: 4, kind: input, shape index: {}]
  %s5 = inlined_call_operand.vmem [shape: f32[1,1,16], index: 5, kind: output, shape index: {}]
  %s6 = sld [smem:[#allocation0]]
  $region30: #{binary_cancer_forward.1} parent=0
    _
  %s8 = ssub.s32 1, %s6
  %s9 = scalar_select 0, %s8, %s6
  %v10 = vstv %s4
  %11 = vst [vmem:[#allocation2] sm:$0x1] %v10
  // Predicated region
  $region2: #{binary_cancer_forward.1} parent=0 // pred_check
    _
  $region3: #{binary_cancer_forward.1} parent=0 // pred_check_branch
    %13 = sbr.rel (0) target = $region5
  $region4: #{binary_cancer_forward.1} parent=0 // pred_region
    _
  $region5: #{binary_cancer_forward.1} parent=0 // pred_fallthru
    _
  // Predicated region
  $region6: #{binary_cancer_forward.1} parent=0 // pred_check
    _
  $region7: #{binary_cancer_forward.1} parent=0 // pred_check_branch
    %15 = sbr.rel (0) target = $region9
  $region8: #{binary_cancer_forward.1} parent=0 // pred_region
    _
  $region9: #{binary_cancer_forward.1} parent=0 // pred_fallthru
    _
  // Predicated region
  $region10: #{binary_cancer_forward.1} parent=0 // pred_check
    _
  $region11: #{binary_cancer_forward.1} parent=0 // pred_check_branch
    %17 = sbr.rel (0) target = $region13
  $region12: #{binary_cancer_forward.1} parent=0 // pred_region
    _
  $region13: #{binary_cancer_forward.1} parent=0 // pred_fallthru
    _
  // Predicated region
  $region14: #{binary_cancer_forward.1} parent=0 // pred_check
    _
  $region15: #{binary_cancer_forward.1} parent=0 // pred_check_branch
    %19 = sbr.rel (0) target = $region17
  $region16: #{binary_cancer_forward.1} parent=0 // pred_region
    _
  $region17: #{binary_cancer_forward.1} parent=0 // pred_fallthru
    _
  // Predicated region
  $region18: #{binary_cancer_forward.1} parent=0 // pred_check
    _
  $region19: #{binary_cancer_forward.1} parent=0 // pred_check_branch
    %21 = sbr.rel (0) target = $region21
  $region20: #{binary_cancer_forward.1} parent=0 // pred_region
    _
  $region21: #{binary_cancer_forward.1} parent=0 // pred_fallthru
    _
  %v22 = vld [vmem:[%s0] sm:$0xff]
  %v23 = vld [vmem:[%s0 + $0x8] sm:$0xff]
  %v24 = vld [vmem:[%s1] sm:$0xff]
  %v25 = vld [vmem:[%s1 + $0x8] sm:$0x7f]
  %v26 = vld [vmem:[%s2] sm:$0xff]
  %v27 = vld [vmem:[%s2 + $0x8] sm:$0x7f]
  %29 = vset.pattern.permute.xlu0 0
  %30 = vperm.xlu0 %29, %v26
  %v31 = vpop.permute.xlu0 %30
  %34 = vset.pattern.permute.xlu0 0
  %35 = vperm.xlu0 %34, %v27
  %v36 = vpop.permute.xlu0 %35
  %vm38 = vcmask 244736
  %v40 = vsel %vm38, %v24, 0
  %v43 = vsel %vm38, %v25, 0
  %v46 = vsel %vm38, %v22, 0
  %v49 = vsel %vm38, %v23, 0
  %51 = vmatprep.subr.mxu0 0.0
  %52 = vmatpush1.xpose.msra.mxu0 %v46
  %53 = vmatprep.subr.mxu0 0.0
  %54 = vmatpush1.xpose.msra.mxu0 %v49
  %55 = vmatprep.subr.mxu0 0.0
  %56 = vmatpush1.xpose.msra.mxu0 0.0
  %57 = vmatprep.subr.mxu0 0.0
  %58 = vmatpush1.xpose.msra.mxu0 0.0
  %59 = vmatprep.subr.mxu0 0.0
  %60 = vmatpush1.xpose.msra.mxu0 0.0
  %61 = vmatprep.subr.mxu0 0.0
  %62 = vmatpush1.xpose.msra.mxu0 0.0
  %63 = vmatprep.subr.mxu0 0.0
  %64 = vmatpush1.xpose.msra.mxu0 0.0
  %65 = vmatprep.subr.mxu0 0.0
  %66 = vmatpush1.xpose.msra.mxu0 0.0
  %67 = vmatprep.subr.mxu0 0.0
  %68 = vmatpush1.xpose.msra.mxu0 0.0
  %69 = vmatprep.subr.mxu0 0.0
  %70 = vmatpush1.xpose.msra.mxu0 0.0
  %71 = vmatprep.subr.mxu0 0.0
  %72 = vmatpush1.xpose.msra.mxu0 0.0
  %73 = vmatprep.subr.mxu0 0.0
  %74 = vmatpush1.xpose.msra.mxu0 0.0
  %75 = vmatprep.subr.mxu0 0.0
  %76 = vmatpush1.xpose.msra.mxu0 0.0
  %77 = vmatprep.subr.mxu0 0.0
  %78 = vmatpush1.xpose.msra.mxu0 0.0
  %79 = vmatprep.subr.mxu0 0.0
  %80 = vmatpush1.xpose.msra.mxu0 0.0
  %81 = vmatprep.subr.mxu0 0.0
  %82 = vmatpush1.xpose.msra.mxu0 0.0
  %83 = vmatprep.subr.mxu0 0.0
  %84 = vmatpush1.xpose.msra.mxu0 0.0
  %85 = vmatprep.subr.mxu0 0.0
  %86 = vmatpush1.xpose.msra.mxu0 0.0
  %87 = vmatprep.subr.mxu0 0.0
  %88 = vmatpush1.xpose.msra.mxu0 0.0
  %89 = vmatprep.subr.mxu0 0.0
  %90 = vmatpush1.xpose.msra.mxu0 0.0
  %91 = vmatprep.subr.mxu0 0.0
  %92 = vmatpush1.xpose.msra.mxu0 0.0
  %93 = vmatprep.subr.mxu0 0.0
  %94 = vmatpush1.xpose.msra.mxu0 0.0
  %95 = vmatprep.subr.mxu0 0.0
  %96 = vmatpush1.xpose.msra.mxu0 0.0
  %97 = vmatprep.subr.mxu0 0.0
  %98 = vmatpush1.xpose.msra.mxu0 0.0
  %99 = vmatprep.subr.mxu0 0.0
  %100 = vmatpush1.xpose.msra.mxu0 0.0
  %101 = vmatprep.subr.mxu0 0.0
  %102 = vmatpush1.xpose.msra.mxu0 0.0
  %103 = vmatprep.subr.mxu0 0.0
  %104 = vmatpush1.xpose.msra.mxu0 0.0
  %105 = vmatprep.subr.mxu0 0.0
  %106 = vmatpush1.xpose.msra.mxu0 0.0
  %107 = vmatprep.subr.mxu0 0.0
  %108 = vmatpush1.xpose.msra.mxu0 0.0
  %109 = vmatprep.subr.mxu0 0.0
  %110 = vmatpush1.xpose.msra.mxu0 0.0
  %111 = vmatprep.subr.mxu0 0.0
  %112 = vmatpush1.xpose.msra.mxu0 0.0
  %113 = vmatprep.subr.mxu0 0.0
  %114 = vmatpush1.xpose.msra.mxu0 0.0
  %115 = vmatprep.mubr.f32.mxu0 0.0
  %116 = vmatmul.mubr.f32.gmra.mrb[0].mxu0 %v40
  %v117 = vpop.f32.mrb[0].mxu0
  %v118 = vadd.f32 %v31, %v117
  %v119 = vpop.f32.mrb[0].mxu0
  %120 = vmatprep.mubr.f32.mxu0 0.0
  %121 = vmatmul.mubr.f32.gmra.mrb[0].mxu0 %v43
  %v122 = vpop.f32.mrb[0].mxu0
  %v123 = vadd.f32 %v36, %v122
  %v124 = vpop.f32.mrb[0].mxu0
  %125 = vdwg.mxu0
  %v126 = vmax.f32 %v118, 0.0
  %v127 = vmax.f32 %v123, 0.0
  %v128 = vld [vmem:[%s3] sm:$0x1]
  %v129 = vld [vmem:[#allocation2] sm:$0x1]
  %131 = vset.pattern.permute.xlu0 0
  %132 = vperm.xlu0 %131, %v129
  %v133 = vpop.permute.xlu0 %132
  %v135 = vlaneseq
  %v136 = vshrl.u32 %v135, 7
  %v137 = vsub.s32 0, %v136
  %v138 = vrot.slane %v133, %v137
  %vm139 = vcmask 121856
  %v141 = vsel %vm139, %v128, 0
  %vm143 = vcmask 1046528
  %v145 = vsel %vm143, %v127, 0
  %147 = vmatprep.subr.mxu0 0.0
  %148 = vmatpush1.msra.mxu0 %v126
  %149 = vmatprep.subr.mxu0 0.0
  %150 = vmatpush1.msra.mxu0 %v145
  %151 = vmatprep.subr.mxu0 0.0
  %152 = vmatpush1.msra.mxu0 0.0
  %153 = vmatprep.subr.mxu0 0.0
  %154 = vmatpush1.msra.mxu0 0.0
  %155 = vmatprep.subr.mxu0 0.0
  %156 = vmatpush1.msra.mxu0 0.0
  %157 = vmatprep.subr.mxu0 0.0
  %158 = vmatpush1.msra.mxu0 0.0
  %159 = vmatprep.subr.mxu0 0.0
  %160 = vmatpush1.msra.mxu0 0.0
  %161 = vmatprep.subr.mxu0 0.0
  %162 = vmatpush1.msra.mxu0 0.0
  %163 = vmatprep.subr.mxu0 0.0
  %164 = vmatpush1.msra.mxu0 0.0
  %165 = vmatprep.subr.mxu0 0.0
  %166 = vmatpush1.msra.mxu0 0.0
  %167 = vmatprep.subr.mxu0 0.0
  %168 = vmatpush1.msra.mxu0 0.0
  %169 = vmatprep.subr.mxu0 0.0
  %170 = vmatpush1.msra.mxu0 0.0
  %171 = vmatprep.subr.mxu0 0.0
  %172 = vmatpush1.msra.mxu0 0.0
  %173 = vmatprep.subr.mxu0 0.0
  %174 = vmatpush1.msra.mxu0 0.0
  %175 = vmatprep.subr.mxu0 0.0
  %176 = vmatpush1.msra.mxu0 0.0
  %177 = vmatprep.subr.mxu0 0.0
  %178 = vmatpush1.msra.mxu0 0.0
  %179 = vmatprep.subr.mxu0 0.0
  %180 = vmatpush1.msra.mxu0 0.0
  %181 = vmatprep.subr.mxu0 0.0
  %182 = vmatpush1.msra.mxu0 0.0
  %183 = vmatprep.subr.mxu0 0.0
  %184 = vmatpush1.msra.mxu0 0.0
  %185 = vmatprep.subr.mxu0 0.0
  %186 = vmatpush1.msra.mxu0 0.0
  %187 = vmatprep.subr.mxu0 0.0
  %188 = vmatpush1.msra.mxu0 0.0
  %189 = vmatprep.subr.mxu0 0.0
  %190 = vmatpush1.msra.mxu0 0.0
  %191 = vmatprep.subr.mxu0 0.0
  %192 = vmatpush1.msra.mxu0 0.0
  %193 = vmatprep.subr.mxu0 0.0
  %194 = vmatpush1.msra.mxu0 0.0
  %195 = vmatprep.subr.mxu0 0.0
  %196 = vmatpush1.msra.mxu0 0.0
  %197 = vmatprep.subr.mxu0 0.0
  %198 = vmatpush1.msra.mxu0 0.0
  %199 = vmatprep.subr.mxu0 0.0
  %200 = vmatpush1.msra.mxu0 0.0
  %201 = vmatprep.subr.mxu0 0.0
  %202 = vmatpush1.msra.mxu0 0.0
  %203 = vmatprep.subr.mxu0 0.0
  %204 = vmatpush1.msra.mxu0 0.0
  %205 = vmatprep.subr.mxu0 0.0
  %206 = vmatpush1.msra.mxu0 0.0
  %207 = vmatprep.subr.mxu0 0.0
  %208 = vmatpush1.msra.mxu0 0.0
  %209 = vmatprep.subr.mxu0 0.0
  %210 = vmatpush1.msra.mxu0 0.0
  %211 = vmatprep.mubr.f32.mxu0 0.0
  %212 = vmatmul.mubr.f32.gmra.mrb[0].mxu0 %v141
  %v213 = vpop.f32.mrb[0].mxu0
  %v214 = vadd.f32 %v138, %v213
  %v215 = vpop.f32.mrb[0].mxu0
  %216 = vdwg.mxu0
  %v217 = vxor.u32 %v214, 2147483648
  %v218 = vmul.f32 %v217, 1.442695
  %v219 = vpow.pop %v218
  %v220 = vadd.f32 %v219, 1.0
  %v221 = vrcp.pop %v220
  %v222 = vmul.f32 1.0, %v221
  %vm223 = vcmask 122880
  %224 = vst.msk [vmem:[%s5] sm:$0x1] %vm223, %v222
  // Predicated region
  $region22: #{binary_cancer_forward.1} parent=0 // pred_check
    _
  $region23: #{binary_cancer_forward.1} parent=0 // pred_check_branch
    %226 = sbr.rel (0) target = $region25
  $region24: #{binary_cancer_forward.1} parent=0 // pred_region
    _
  $region25: #{binary_cancer_forward.1} parent=0 // pred_fallthru
    _
  // Predicated region
  $region26: #{binary_cancer_forward.1} parent=0 // pred_check
    _
  $region27: #{binary_cancer_forward.1} parent=0 // pred_check_branch
    %228 = sbr.rel (0) target = $region29
  $region28: #{binary_cancer_forward.1} parent=0 // pred_region
    _
  $region29: #{binary_cancer_forward.1} parent=0 // pred_fallthru
    _

</llo_original>
